<compile_context>
chip_gen: v6e
topology: v6e:2x2x1
jax: 0.10.0
libtpu: 0.0.40
codegen_flags: <defaults>
</compile_context>

<pallas_src>
from functools import partial

import jax
import jax.numpy as jnp
from jax.experimental import pallas as pl
from jax.experimental.pallas import tpu as pltpu


def _rrrb_kernel(xt_ref, wst_ref, bc_ref, wr_ref, br_ref, o_ref, col_ref, *, W, TH):
    """One (batch, row-tile) step.

    xt_ref : (1, 1, C, (TH+4)*W)  halo'd input window (2 zero rows at image edges)
    wst_ref: (C2, 9*C)            stacked composite 3x3 taps (reparameterized)
    bc_ref : (C2, 1)              combined fea/expand bias
    wr_ref : (C, C2)              reduce 1x1 weights
    br_ref : (C, 1)               reduce bias
    o_ref  : (1, C, TH*W)         output tile (lane-dense: TH*W % 128 == 0 or == H*W)
    col_ref: (9*C, TH*W)          im2col scratch in VMEM
    """
    C = o_ref.shape[1]
    L = TH * W

    window = xt_ref[0, 0]                               # (C, (TH+4)*W)

    # Column masks for the horizontal +/-1 taps (computed once, reused 3x each).
    col_idx = jax.lax.broadcasted_iota(jnp.int32, (1, L), 1) % W
    mask_l = col_idx > 0                                # has a left neighbor  (dx = -1)
    mask_r = col_idx < (W - 1)                          # has a right neighbor (dx = +1)

    # Un-shifted rows of this tile (used for the final residual).
    x_band = window[:, 2 * W: 2 * W + L]

    # Assemble the im2col matrix: row block k holds the (dy, dx)-shifted,
    # zero-masked input.  Row shifts come from the halo rows (static slices);
    # column shifts wrap within the flat layout and are zeroed by the masks.
    k = 0
    for dy in (-1, 0, 1):
        for dx in (-1, 0, 1):
            s = (2 + dy) * W + dx
            band = window[:, s: s + L]
            if dx == -1:
                band = jnp.where(mask_l, band, 0)
            elif dx == 1:
                band = jnp.where(mask_r, band, 0)
            col_ref[k * C:(k + 1) * C, :] = band
            k += 1

    # Single fused "expand + pad + fea_conv + identity" matmul.
    feat = jnp.dot(wst_ref[...], col_ref[...], preferred_element_type=jnp.float32)
    feat = feat + bc_ref[...]                           # (C2, L), f32

    # reduce_conv (1x1) + bias + block residual.
    red = jnp.dot(wr_ref[...], feat, preferred_element_type=jnp.float32)
    red = red + br_ref[...]                             # (C, L), f32
    o_ref[0] = (red + x_band.astype(jnp.float32)).astype(o_ref.dtype)


def _pick_tile_rows(H, W, C, C2, budget_bytes=8 * 2**20):
    """Largest row-tile TH that divides H, keeps the flattened tile lane-aligned
    (TH*W multiple of 128, unless TH == H), and fits a conservative VMEM budget
    (sized for v7x's 64 MiB VMEM / 32 MiB scoped default)."""
    legal = [th for th in range(H, 0, -1)
             if H % th == 0 and (th == H or (th * W) % 128 == 0)]
    for th in legal:
        step = 4 * (2 * C * (th + 4) * W + (9 * C + 4 * C2 + 4 * C) * th * W)
        if step <= budget_bytes:
            return th
    return legal[-1]


def rrrb_pallas(x_nchw, We, be, Wf, bf, Wr, br, *, tile_rows=None):
    """x_nchw: (B, C, H, W).  Weights in PyTorch Conv2d layout:
       We: (2C, C, 1, 1), be: (2C,), Wf: (2C, 2C, 3, 3), bf: (2C,),
       Wr: (C, 2C, 1, 1), br: (C,)."""
    B, C, H, W = x_nchw.shape
    C2 = We.shape[0]
    xdt = x_nchw.dtype

    # ---- reparameterized weights (precomputed in f32 in the wrapper) ----
    W1 = We[:, :, 0, 0].astype(jnp.float32)                    # (C2, C)
    b1 = be.astype(jnp.float32)                                # (C2,)
    Wf32 = Wf.astype(jnp.float32)                              # (C2, C2, 3, 3)
    taps = []
    for ky in range(3):
        for kx in range(3):
            wc = Wf32[:, :, ky, kx] @ W1                       # (C2, C)
            if ky == 1 and kx == 1:
                wc = wc + W1                                   # absorb "+ out_identity"
            taps.append(wc)
    W_stack = jnp.concatenate(taps, axis=1).astype(xdt)        # (C2, 9*C)
    # fea bias + border/interior expand-bias contribution + identity bias.
    bc = (bf.astype(jnp.float32) + Wf32.sum(axis=(2, 3)) @ b1 + b1).reshape(C2, 1)
    WrM = Wr[:, :, 0, 0].astype(jnp.float32)                   # (C, C2)
    brc = br.astype(jnp.float32).reshape(C, 1)                 # (C, 1)

    # ---- spatial tiling ----
    TH = tile_rows if tile_rows is not None else _pick_tile_rows(H, W, C, C2)
    assert H % TH == 0 and (TH == H or (TH * W) % 128 == 0), "invalid tile_rows"
    nT = H // TH
    L = TH * W
    Lt = (TH + 4) * W

    # Zero-pad two rows top/bottom, then build per-tile halo'd row windows and
    # flatten (H, W) onto the lane axis.  No transposes anywhere.
    xp = jnp.pad(x_nchw, ((0, 0), (0, 0), (2, 2), (0, 0)))     # (B, C, H+4, W)
    xt = jnp.stack([xp[:, :, t * TH: t * TH + TH + 4, :] for t in range(nT)], axis=1)
    xt = xt.reshape(B, nT, C, Lt)                              # (B, nT, C, (TH+4)*W)

    itemsize = x_nchw.dtype.itemsize
    step_bytes = 4 * (2 * C * Lt + 2 * C * L + 9 * C * L + 4 * C2 * L
                      + C2 * 9 * C + C * C2 + C2 + C)
    flops = 2 * B * H * W * (9 * C * C2 + C2 * C) + 2 * B * H * W * (C2 + C)
    bytes_accessed = ((B * nT * C * Lt + B * C * H * W) * itemsize
                      + (C2 * 9 * C + C * C2 + C2 + C) * 4)

    out = pl.pallas_call(
        partial(_rrrb_kernel, W=W, TH=TH),
        out_shape=jax.ShapeDtypeStruct((B, C, H * W), xdt),
        grid_spec=pltpu.PrefetchScalarGridSpec(
            num_scalar_prefetch=0,
            grid=(B, nT),
            in_specs=[
                pl.BlockSpec((1, 1, C, Lt), lambda b, t: (b, t, 0, 0)),
                pl.BlockSpec((C2, 9 * C), lambda b, t: (0, 0)),
                pl.BlockSpec((C2, 1), lambda b, t: (0, 0)),
                pl.BlockSpec((C, C2), lambda b, t: (0, 0)),
                pl.BlockSpec((C, 1), lambda b, t: (0, 0)),
            ],
            out_specs=pl.BlockSpec((1, C, L), lambda b, t: (b, 0, t)),
            scratch_shapes=[pltpu.VMEM((9 * C, L), xdt)],
        ),
        compiler_params=pltpu.CompilerParams(
            dimension_semantics=("parallel", "parallel"),
            vmem_limit_bytes=int(min(max(4 * step_bytes, 16 * 2**20), 64 * 2**20)),
        ),
        cost_estimate=pl.CostEstimate(
            flops=int(flops), transcendentals=0, bytes_accessed=int(bytes_accessed)),
    )(xt, W_stack, bc, WrM, brc)

    return out.reshape(B, C, H, W)


def rrrb_reference(x, We, be, Wf, bf, Wr, br):
    """Pure-JAX NCHW reference reproducing the PyTorch forward exactly."""
    out = jnp.einsum('bchw,oc->bohw', x, We[:, :, 0, 0]) + be[None, :, None, None]
    out_id = out
    _, C2, H, W = out.shape
    padded = jnp.pad(out, ((0, 0), (0, 0), (1, 1), (1, 1)))
    ii = jnp.arange(H + 2)[None, None, :, None]
    jj = jnp.arange(W + 2)[None, None, None, :]
    border = (ii == 0) | (ii == H + 1) | (jj == 0) | (jj == W + 1)
    bias_map = jnp.broadcast_to(be[None, :, None, None], padded.shape)
    padded = jnp.where(border, bias_map, padded)
    conv = jax.lax.conv_general_dilated(
        padded, Wf, window_strides=(1, 1), padding='VALID',
        dimension_numbers=('NCHW', 'OIHW', 'NCHW'))
    conv = conv + bf[None, :, None, None] + out_id
    red = jnp.einsum('bchw,oc->bohw', conv, Wr[:, :, 0, 0]) + br[None, :, None, None]
    return red + x


if __name__ == "__main__":
    B, n_feats, ratio, H, W = 2, 4, 2, 16, 16
    C, C2 = n_feats, ratio * n_feats

    key = jax.random.PRNGKey(0)
    ks = jax.random.split(key, 7)
    x = jax.random.normal(ks[0], (B, C, H, W), dtype=jnp.float32)
    # Deterministic synthetic parameters (Conv2d shapes from __init__).
    We = 0.1 * jax.random.normal(ks[1], (C2, C, 1, 1), dtype=jnp.float32)
    be = 0.1 * jax.random.normal(ks[2], (C2,), dtype=jnp.float32)
    Wf = 0.1 * jax.random.normal(ks[3], (C2, C2, 3, 3), dtype=jnp.float32)
    bf = 0.1 * jax.random.normal(ks[4], (C2,), dtype=jnp.float32)
    Wr = 0.1 * jax.random.normal(ks[5], (C, C2, 1, 1), dtype=jnp.float32)
    br = 0.1 * jax.random.normal(ks[6], (C,), dtype=jnp.float32)

    ref = jax.block_until_ready(rrrb_reference(x, We, be, Wf, bf, Wr, br))

    # Auto tile (whole image per grid step) and an explicit 2-tile run that
    # exercises the halo'd spatial-tiling path (TH=8 -> 128-lane output blocks).
    out_auto = jax.block_until_ready(rrrb_pallas(x, We, be, Wf, bf, Wr, br))
    out_tiled = jax.block_until_ready(rrrb_pallas(x, We, be, Wf, bf, Wr, br, tile_rows=8))

    assert out_auto.shape == (B, C, H, W) and out_auto.dtype == jnp.float32
    assert jnp.allclose(out_auto, ref, atol=1e-4, rtol=1e-4), "mismatch (auto tile)"
    assert jnp.allclose(out_tiled, ref, atol=1e-4, rtol=1e-4), "mismatch (tile_rows=8)"

    print("KERNEL_OK")
</pallas_src>

<mosaic_0001>
module attributes {stable_mosaic.version = 11 : i64} {
  func.func @_rrrb_kernel(%arg0: i32, %arg1: i32, %arg2: memref<1x1x4x320xf32, #tpu.memory_space<vmem>>, %arg3: memref<8x36xf32, #tpu.memory_space<vmem>>, %arg4: memref<8x1xf32, #tpu.memory_space<vmem>>, %arg5: memref<4x8xf32, #tpu.memory_space<vmem>>, %arg6: memref<4x1xf32, #tpu.memory_space<vmem>>, %arg7: memref<1x4x256xf32, #tpu.memory_space<vmem>>, %arg8: memref<36x256xf32, #tpu.memory_space<vmem>>) attributes {dimension_semantics = [#tpu.dimension_semantics<parallel>, #tpu.dimension_semantics<parallel>], iteration_bounds = array<i64: 2, 1>, scalar_prefetch = 0 : i64, scratch_operands = 1 : i64, tpu.core_type = #tpu.core_type<tc>, window_params = [{transform_indices = @transform_0, window_bounds = array<i64: 1, 1, 4, 320>}, {pipeline_mode = #tpu.pipeline_mode<synchronous>, transform_indices = @transform_1, window_bounds = array<i64: 8, 36>}, {pipeline_mode = #tpu.pipeline_mode<synchronous>, transform_indices = @transform_2, window_bounds = array<i64: 8, 1>}, {pipeline_mode = #tpu.pipeline_mode<synchronous>, transform_indices = @transform_3, window_bounds = array<i64: 4, 8>}, {pipeline_mode = #tpu.pipeline_mode<synchronous>, transform_indices = @transform_4, window_bounds = array<i64: 4, 1>}, {transform_indices = @transform_5, window_bounds = array<i64: 1, 4, 256>}]} {
    %c0 = arith.constant 0 : index
    %c0_0 = arith.constant 0 : index
    %c0_1 = arith.constant 0 : index
    %c0_2 = arith.constant 0 : index
    %0 = vector.load %arg2[%c0, %c0_0, %c0_1, %c0_2] : memref<1x1x4x320xf32, #tpu.memory_space<vmem>>, vector<1x1x4x320xf32>
    %1 = vector.shape_cast %0 : vector<1x1x4x320xf32> to vector<4x320xf32>
    %2 = tpu.iota {dimensions = array<i32: 1>} : vector<1x256xi32>
    %c16_i32 = arith.constant 16 : i32
    %c0_i32 = arith.constant 0 : i32
    %3 = arith.cmpi eq, %c16_i32, %c0_i32 : i32
    %c1_i32 = arith.constant 1 : i32
    %4 = arith.select %3, %c1_i32, %c16_i32 : i32
    %5 = vector.broadcast %4 : i32 to vector<1x256xi32>
    %6 = arith.remsi %2, %5 : vector<1x256xi32>
    %c0_i32_3 = arith.constant 0 : i32
    %7 = vector.broadcast %c0_i32_3 : i32 to vector<1x256xi32>
    %8 = arith.cmpi ne, %6, %7 : vector<1x256xi32>
    %c0_i32_4 = arith.constant 0 : i32
    %9 = vector.broadcast %c0_i32_4 : i32 to vector<1x256xi32>
    %10 = arith.cmpi slt, %6, %9 : vector<1x256xi32>
    %c0_i32_5 = arith.constant 0 : i32
    %11 = arith.cmpi slt, %4, %c0_i32_5 : i32
    %12 = vector.broadcast %11 : i1 to vector<1x256xi1>
    %13 = vector.broadcast %12 : vector<1x256xi1> to vector<1x256xi1>
    %14 = arith.xori %10, %13 : vector<1x256xi1>
    %15 = arith.andi %14, %8 : vector<1x256xi1>
    %16 = vector.broadcast %4 : i32 to vector<1x256xi32>
    %17 = arith.addi %6, %16 : vector<1x256xi32>
    %18 = arith.select %15, %17, %6 : vector<1x256xi1>, vector<1x256xi32>
    %c0_i32_6 = arith.constant 0 : i32
    %19 = vector.broadcast %c0_i32_6 : i32 to vector<1x256xi32>
    %20 = arith.cmpi sgt, %18, %19 : vector<1x256xi32>
    %c15_i32 = arith.constant 15 : i32
    %21 = vector.broadcast %c15_i32 : i32 to vector<1x256xi32>
    %22 = arith.cmpi slt, %18, %21 : vector<1x256xi32>
    %23 = vector.extract_strided_slice %1 {offsets = [0, 32], sizes = [4, 256], strides = [1, 1]} : vector<4x320xf32> to vector<4x256xf32>
    %24 = vector.extract_strided_slice %1 {offsets = [0, 15], sizes = [4, 256], strides = [1, 1]} : vector<4x320xf32> to vector<4x256xf32>
    %c0_i32_7 = arith.constant 0 : i32
    %25 = arith.sitofp %c0_i32_7 : i32 to f32
    %26 = vector.shape_cast %20 : vector<1x256xi1> to vector<1x256xi1>
    %27 = vector.broadcast %26 : vector<1x256xi1> to vector<4x256xi1>
    %28 = vector.broadcast %25 : f32 to vector<4x256xf32>
    %29 = arith.select %27, %24, %28 : vector<4x256xi1>, vector<4x256xf32>
    %c0_8 = arith.constant 0 : index
    %c0_9 = arith.constant 0 : index
    %30 = vector.load %arg8[%c0_8, %c0_9] : memref<36x256xf32, #tpu.memory_space<vmem>>, vector<4x256xf32>
    tpu.vector_store %arg8[%c0_8, %c0_9], %29 {strides = array<i32>} : memref<36x256xf32, #tpu.memory_space<vmem>>, vector<4x256xf32>,
    %31 = vector.extract_strided_slice %1 {offsets = [0, 16], sizes = [4, 256], strides = [1, 1]} : vector<4x320xf32> to vector<4x256xf32>
    %c4 = arith.constant 4 : index
    %c0_10 = arith.constant 0 : index
    %32 = vector.load %arg8[%c4, %c0_10] : memref<36x256xf32, #tpu.memory_space<vmem>>, vector<4x256xf32>
    tpu.vector_store %arg8[%c4, %c0_10], %31 {strides = array<i32>} : memref<36x256xf32, #tpu.memory_space<vmem>>, vector<4x256xf32>,
    %33 = vector.extract_strided_slice %1 {offsets = [0, 17], sizes = [4, 256], strides = [1, 1]} : vector<4x320xf32> to vector<4x256xf32>
    %c0_i32_11 = arith.constant 0 : i32
    %34 = arith.sitofp %c0_i32_11 : i32 to f32
    %35 = vector.shape_cast %22 : vector<1x256xi1> to vector<1x256xi1>
    %36 = vector.broadcast %35 : vector<1x256xi1> to vector<4x256xi1>
    %37 = vector.broadcast %34 : f32 to vector<4x256xf32>
    %38 = arith.select %36, %33, %37 : vector<4x256xi1>, vector<4x256xf32>
    %c8 = arith.constant 8 : index
    %c0_12 = arith.constant 0 : index
    %39 = vector.load %arg8[%c8, %c0_12] : memref<36x256xf32, #tpu.memory_space<vmem>>, vector<4x256xf32>
    tpu.vector_store %arg8[%c8, %c0_12], %38 {strides = array<i32>} : memref<36x256xf32, #tpu.memory_space<vmem>>, vector<4x256xf32>,
    %40 = vector.extract_strided_slice %1 {offsets = [0, 31], sizes = [4, 256], strides = [1, 1]} : vector<4x320xf32> to vector<4x256xf32>
    %c0_i32_13 = arith.constant 0 : i32
    %41 = arith.sitofp %c0_i32_13 : i32 to f32
    %42 = vector.shape_cast %20 : vector<1x256xi1> to vector<1x256xi1>
    %43 = vector.broadcast %42 : vector<1x256xi1> to vector<4x256xi1>
    %44 = vector.broadcast %41 : f32 to vector<4x256xf32>
    %45 = arith.select %43, %40, %44 : vector<4x256xi1>, vector<4x256xf32>
    %c12 = arith.constant 12 : index
    %c0_14 = arith.constant 0 : index
    %46 = vector.load %arg8[%c12, %c0_14] : memref<36x256xf32, #tpu.memory_space<vmem>>, vector<4x256xf32>
    tpu.vector_store %arg8[%c12, %c0_14], %45 {strides = array<i32>} : memref<36x256xf32, #tpu.memory_space<vmem>>, vector<4x256xf32>,
    %47 = vector.extract_strided_slice %1 {offsets = [0, 32], sizes = [4, 256], strides = [1, 1]} : vector<4x320xf32> to vector<4x256xf32>
    %c16 = arith.constant 16 : index
    %c0_15 = arith.constant 0 : index
    %48 = vector.load %arg8[%c16, %c0_15] : memref<36x256xf32, #tpu.memory_space<vmem>>, vector<4x256xf32>
    tpu.vector_store %arg8[%c16, %c0_15], %47 {strides = array<i32>} : memref<36x256xf32, #tpu.memory_space<vmem>>, vector<4x256xf32>,
    %49 = vector.extract_strided_slice %1 {offsets = [0, 33], sizes = [4, 256], strides = [1, 1]} : vector<4x320xf32> to vector<4x256xf32>
    %c0_i32_16 = arith.constant 0 : i32
    %50 = arith.sitofp %c0_i32_16 : i32 to f32
    %51 = vector.shape_cast %22 : vector<1x256xi1> to vector<1x256xi1>
    %52 = vector.broadcast %51 : vector<1x256xi1> to vector<4x256xi1>
    %53 = vector.broadcast %50 : f32 to vector<4x256xf32>
    %54 = arith.select %52, %49, %53 : vector<4x256xi1>, vector<4x256xf32>
    %c20 = arith.constant 20 : index
    %c0_17 = arith.constant 0 : index
    %55 = vector.load %arg8[%c20, %c0_17] : memref<36x256xf32, #tpu.memory_space<vmem>>, vector<4x256xf32>
    tpu.vector_store %arg8[%c20, %c0_17], %54 {strides = array<i32>} : memref<36x256xf32, #tpu.memory_space<vmem>>, vector<4x256xf32>,
    %56 = vector.extract_strided_slice %1 {offsets = [0, 47], sizes = [4, 256], strides = [1, 1]} : vector<4x320xf32> to vector<4x256xf32>
    %c0_i32_18 = arith.constant 0 : i32
    %57 = arith.sitofp %c0_i32_18 : i32 to f32
    %58 = vector.shape_cast %20 : vector<1x256xi1> to vector<1x256xi1>
    %59 = vector.broadcast %58 : vector<1x256xi1> to vector<4x256xi1>
    %60 = vector.broadcast %57 : f32 to vector<4x256xf32>
    %61 = arith.select %59, %56, %60 : vector<4x256xi1>, vector<4x256xf32>
    %c24 = arith.constant 24 : index
    %c0_19 = arith.constant 0 : index
    %62 = vector.load %arg8[%c24, %c0_19] : memref<36x256xf32, #tpu.memory_space<vmem>>, vector<4x256xf32>
    tpu.vector_store %arg8[%c24, %c0_19], %61 {strides = array<i32>} : memref<36x256xf32, #tpu.memory_space<vmem>>, vector<4x256xf32>,
    %63 = vector.extract_strided_slice %1 {offsets = [0, 48], sizes = [4, 256], strides = [1, 1]} : vector<4x320xf32> to vector<4x256xf32>
    %c28 = arith.constant 28 : index
    %c0_20 = arith.constant 0 : index
    %64 = vector.load %arg8[%c28, %c0_20] : memref<36x256xf32, #tpu.memory_space<vmem>>, vector<4x256xf32>
    tpu.vector_store %arg8[%c28, %c0_20], %63 {strides = array<i32>} : memref<36x256xf32, #tpu.memory_space<vmem>>, vector<4x256xf32>,
    %65 = vector.extract_strided_slice %1 {offsets = [0, 49], sizes = [4, 256], strides = [1, 1]} : vector<4x320xf32> to vector<4x256xf32>
    %c0_i32_21 = arith.constant 0 : i32
    %66 = arith.sitofp %c0_i32_21 : i32 to f32
    %67 = vector.shape_cast %22 : vector<1x256xi1> to vector<1x256xi1>
    %68 = vector.broadcast %67 : vector<1x256xi1> to vector<4x256xi1>
    %69 = vector.broadcast %66 : f32 to vector<4x256xf32>
    %70 = arith.select %68, %65, %69 : vector<4x256xi1>, vector<4x256xf32>
    %c32 = arith.constant 32 : index
    %c0_22 = arith.constant 0 : index
    %71 = vector.load %arg8[%c32, %c0_22] : memref<36x256xf32, #tpu.memory_space<vmem>>, vector<4x256xf32>
    tpu.vector_store %arg8[%c32, %c0_22], %70 {strides = array<i32>} : memref<36x256xf32, #tpu.memory_space<vmem>>, vector<4x256xf32>,
    %c0_23 = arith.constant 0 : index
    %c0_24 = arith.constant 0 : index
    %72 = vector.load %arg3[%c0_23, %c0_24] : memref<8x36xf32, #tpu.memory_space<vmem>>, vector<8x36xf32>
    %c0_25 = arith.constant 0 : index
    %c0_26 = arith.constant 0 : index
    %73 = vector.load %arg8[%c0_25, %c0_26] : memref<36x256xf32, #tpu.memory_space<vmem>>, vector<36x256xf32>
    %cst = arith.constant dense<0.000000e+00> : vector<8x256xf32>
    %74 = tpu.matmul %72, %73, %cst {dimension_numbers = #tpu.dot_dimension_numbers<[1], [0], [0], [1], [0, 0, 1, 1], [], []>} : vector<8x36xf32>, vector<36x256xf32>, vector<8x256xf32> -> vector<8x256xf32>
    %c0_27 = arith.constant 0 : index
    %c0_28 = arith.constant 0 : index
    %75 = vector.load %arg4[%c0_27, %c0_28] : memref<8x1xf32, #tpu.memory_space<vmem>>, vector<8x1xf32>
    %76 = vector.broadcast %75 : vector<8x1xf32> to vector<8x256xf32>
    %77 = arith.addf %74, %76 : vector<8x256xf32>
    %c0_29 = arith.constant 0 : index
    %c0_30 = arith.constant 0 : index
    %78 = vector.load %arg5[%c0_29, %c0_30] : memref<4x8xf32, #tpu.memory_space<vmem>>, vector<4x8xf32>
    %cst_31 = arith.constant dense<0.000000e+00> : vector<4x256xf32>
    %79 = tpu.matmul %78, %77, %cst_31 {dimension_numbers = #tpu.dot_dimension_numbers<[1], [0], [0], [1], [0, 0, 1, 1], [], []>} : vector<4x8xf32>, vector<8x256xf32>, vector<4x256xf32> -> vector<4x256xf32>
    %c0_32 = arith.constant 0 : index
    %c0_33 = arith.constant 0 : index
    %80 = vector.load %arg6[%c0_32, %c0_33] : memref<4x1xf32, #tpu.memory_space<vmem>>, vector<4x1xf32>
    %81 = vector.broadcast %80 : vector<4x1xf32> to vector<4x256xf32>
    %82 = arith.addf %79, %81 : vector<4x256xf32>
    %83 = arith.addf %82, %23 : vector<4x256xf32>
    %c0_34 = arith.constant 0 : index
    %c0_35 = arith.constant 0 : index
    %c0_36 = arith.constant 0 : index
    %84 = vector.load %arg7[%c0_34, %c0_35, %c0_36] : memref<1x4x256xf32, #tpu.memory_space<vmem>>, vector<1x4x256xf32>
    %85 = vector.shape_cast %84 : vector<1x4x256xf32> to vector<4x256xf32>
    %86 = vector.shape_cast %83 : vector<4x256xf32> to vector<1x4x256xf32>
    tpu.vector_store %arg7[%c0_34, %c0_35, %c0_36], %86 {strides = array<i32>} : memref<1x4x256xf32, #tpu.memory_space<vmem>>, vector<1x4x256xf32>,
    return
  }
  func.func @transform_0(%arg0: i32, %arg1: i32) -> (i32, i32, i32, i32) {
    %c0_i32 = arith.constant 0 : i32
    %c0_i32_0 = arith.constant 0 : i32
    %c0_i32_1 = arith.constant 0 : i32
    return %arg0, %arg1, %c0_i32, %c0_i32_0 : i32, i32, i32, i32
  }
  func.func @transform_1(%arg0: i32, %arg1: i32) -> (i32, i32) {
    %c0_i32 = arith.constant 0 : i32
    %c0_i32_0 = arith.constant 0 : i32
    %c0_i32_1 = arith.constant 0 : i32
    return %c0_i32, %c0_i32_0 : i32, i32
  }
  func.func @transform_2(%arg0: i32, %arg1: i32) -> (i32, i32) {
    %c0_i32 = arith.constant 0 : i32
    %c0_i32_0 = arith.constant 0 : i32
    %c0_i32_1 = arith.constant 0 : i32
    return %c0_i32, %c0_i32_0 : i32, i32
  }
  func.func @transform_3(%arg0: i32, %arg1: i32) -> (i32, i32) {
    %c0_i32 = arith.constant 0 : i32
    %c0_i32_0 = arith.constant 0 : i32
    %c0_i32_1 = arith.constant 0 : i32
    return %c0_i32, %c0_i32_0 : i32, i32
  }
  func.func @transform_4(%arg0: i32, %arg1: i32) -> (i32, i32) {
    %c0_i32 = arith.constant 0 : i32
    %c0_i32_0 = arith.constant 0 : i32
    %c0_i32_1 = arith.constant 0 : i32
    return %c0_i32, %c0_i32_0 : i32, i32
  }
  func.func @transform_5(%arg0: i32, %arg1: i32) -> (i32, i32, i32) {
    %c0_i32 = arith.constant 0 : i32
    %c0_i32_0 = arith.constant 0 : i32
    return %arg0, %c0_i32, %arg1 : i32, i32, i32
  }
}

</mosaic_0001>

<llo_original>
// kernel: tpu_custom_call.1
$region0: #{tpu_custom_call.1}
  #allocation0 [shape = 'u32[]', space=smem, size = 0x4, offset = 0x4, fixed_abs, tag = 'smem constant byte address 0x4 - core index']
  #allocation1 [shape = 'u32[144,128]{1,0:T(1,128)}', space=vmem, size = 0x12000, scoped, tag = 'internal scratch']
  #allocation2 [shape = 'f32[36,256]{1,0:T(8,128)}', space=vmem, size = 0xa000, scoped, tag = 'scratch operand']
  %s0 = inlined_call_operand.hbm [shape: f32[2,1,4,320], index: 0, kind: input, shape index: {}]
  %s1 = inlined_call_operand.vmem [shape: f32[8,36], index: 1, kind: input, shape index: {}]
  %s2 = inlined_call_operand.vmem [shape: f32[8,1], index: 2, kind: input, shape index: {}]
  %s3 = inlined_call_operand.vmem [shape: f32[4,8], index: 3, kind: input, shape index: {}]
  %s4 = inlined_call_operand.vmem [shape: f32[4,1], index: 4, kind: input, shape index: {}]
  %s5 = inlined_call_operand.hbm [shape: f32[2,4,256], index: 5, kind: output, shape index: {}]
  %s6 = sld [smem:[#allocation0]]
  $region57: #{tpu_custom_call.1} parent=0
    _
  %s8 = ssub.s32 1, %s6
  %s9 = scalar_select 0, %s8, %s6
  $region1: #{tpu_custom_call.1} parent=0
    #allocation3 [shape = 'u8[12288]{0}', space=vmem, size = 0x3000, scoped, tag = 'input window, operand 0']
    #allocation4 [shape = 's32[2]{0}', space=sflag, size = 0x8, scoped, tag = 'scoped memory for tpu_custom_call.1']
    #allocation5 [shape = 's32[2]{0}', space=sflag, size = 0x8, scoped, tag = 'scoped memory for tpu_custom_call.1']
    #allocation6 [shape = 'u8[8192]{0}', space=vmem, size = 0x2000, scoped, tag = 'output window, operand 0']
    %10 = vsyncpa [#allocation4], 0
    %s11 = scalar_lea.sflag [#allocation4], 1
    %12 = vsyncpa %s11, 0
    %13 = vsyncpa [#allocation5], 0
    %s14 = scalar_lea.sflag [#allocation5], 1
    %15 = vsyncpa %s14, 0
    loop: start=0, step=1, limit=4
    $region2: #{tpu_custom_call.1} parent=1 // loop_pre_header
      _
    $region3: #{tpu_custom_call.1} parent=1 // loop_header
      %s17 = sphi 0, %s21
      %p18 = scmp.ge.s32.totalorder %s17, 4
      %s24 = sphi 0, %s36
      %s25 = sphi 0, %s32
      %s26 = sphi 0, %s24
      %s27 = sphi 0, %s25
      %s28 = sphi 0, %s26
      %s29 = sphi 0, %s27
      %s41 = sphi 0, %s43
      %s44 = sphi 0, %s41
      %s45 = sphi 0, %s44
      %s61 = sphi 0, %s45
      %s65 = sphi 0, %s65
      %s67 = sphi 0, %s65
      %s68 = sphi 0, %s67
      %s82 = sphi 0, %s68
      %s86 = sphi 0, %s86
      %s88 = sphi 0, %s86
      %s89 = sphi 0, %s88
      %s103 = sphi 0, %s89
      %s107 = sphi 0, %s107
      %s109 = sphi 0, %s107
      %s110 = sphi 0, %s109
      %s124 = sphi 0, %s110
      %s128 = sphi 0, %s128
      %s130 = sphi 0, %s128
      %s131 = sphi 0, %s130
      %s145 = sphi 0, %s131
      %s153 = sphi 0, %s155
      %s156 = sphi 0, %s153
      %s157 = sphi 0, %s156
      %s173 = sphi 0, %s157
    $region4: #{tpu_custom_call.1} parent=1 // loop_header_branch
      %20 = sbr.rel (%p18) target = $region8
    $region5: #{tpu_custom_call.1} parent=1 // loop_body
      %s22 = ssub.s32 %s17, 1
      %s23 = ssub.s32 %s17, 2
      %s30 = sadd.s32 1, %s25
      %p31 = scmp.ge.s32.totalorder %s30, 1
      %s32 = scalar_select %p31, 0, %s30
      %s33 = sadd.s32 1, %s24
      %s34 = scalar_select %p31, %s33, %s24
      %p35 = scmp.ge.s32.totalorder %s34, 2
      %s36 = scalar_select %p35, 0, %s34
      %s37 = ssub.s32 %s24, %s36
      %s38 = ssub.s32 %s25, %s32
      %s39 = sor.u32 %s37, %s38
      %p40 = scmp.eq.s32.totalorder %s39, 0
      %s42 = sadd.s32 %s41, 1
      %s43 = scalar_select %p40, %s41, %s42
      %p46 = pneg %p40
      %p47 = scmp.eq.s32.totalorder %s17, 1
      %p48 = por %p46, %p47
      %p49 = scmp.ne.s32.totalorder %s41, %s44
      %p50 = scmp.eq.s32.totalorder %s17, 0
      %p51 = por %p49, %p50
      %p52 = scmp.ne.s32.totalorder %s41, %s44
      %p53 = scmp.eq.s32.totalorder %s22, 1
      %p54 = por %p52, %p53
      %p55 = scmp.ne.s32.totalorder %s44, %s45
      %p56 = scmp.eq.s32.totalorder %s22, 0
      %p57 = por %p55, %p56
      %p58 = scmp.ne.s32.totalorder %s44, %s45
      %p59 = scmp.eq.s32.totalorder %s23, 1
      %p60 = por %p58, %p59
      %p62 = scmp.ne.s32.totalorder %s45, %s61
      %p63 = scmp.eq.s32.totalorder %s23, 0
      %p64 = por %p62, %p63
      %s66 = sadd.s32 %s65, 1
      %p69 = scmp.eq.s32.totalorder %s17, 1
      %p70 = scmp.ne.s32.totalorder %s65, %s67
      %p71 = scmp.eq.s32.totalorder %s17, 0
      %p72 = por %p70, %p71
      %p73 = scmp.ne.s32.totalorder %s65, %s67
      %p74 = scmp.eq.s32.totalorder %s22, 1
      %p75 = por %p73, %p74
      %p76 = scmp.ne.s32.totalorder %s67, %s68
      %p77 = scmp.eq.s32.totalorder %s22, 0
      %p78 = por %p76, %p77
      %p79 = scmp.ne.s32.totalorder %s67, %s68
      %p80 = scmp.eq.s32.totalorder %s23, 1
      %p81 = por %p79, %p80
      %p83 = scmp.ne.s32.totalorder %s68, %s82
      %p84 = scmp.eq.s32.totalorder %s23, 0
      %p85 = por %p83, %p84
      %s87 = sadd.s32 %s86, 1
      %p90 = scmp.eq.s32.totalorder %s17, 1
      %p91 = scmp.ne.s32.totalorder %s86, %s88
      %p92 = scmp.eq.s32.totalorder %s17, 0
      %p93 = por %p91, %p92
      %p94 = scmp.ne.s32.totalorder %s86, %s88
      %p95 = scmp.eq.s32.totalorder %s22, 1
      %p96 = por %p94, %p95
      %p97 = scmp.ne.s32.totalorder %s88, %s89
      %p98 = scmp.eq.s32.totalorder %s22, 0
      %p99 = por %p97, %p98
      %p100 = scmp.ne.s32.totalorder %s88, %s89
      %p101 = scmp.eq.s32.totalorder %s23, 1
      %p102 = por %p100, %p101
      %p104 = scmp.ne.s32.totalorder %s89, %s103
      %p105 = scmp.eq.s32.totalorder %s23, 0
      %p106 = por %p104, %p105
      %s108 = sadd.s32 %s107, 1
      %p111 = scmp.eq.s32.totalorder %s17, 1
      %p112 = scmp.ne.s32.totalorder %s107, %s109
      %p113 = scmp.eq.s32.totalorder %s17, 0
      %p114 = por %p112, %p113
      %p115 = scmp.ne.s32.totalorder %s107, %s109
      %p116 = scmp.eq.s32.totalorder %s22, 1
      %p117 = por %p115, %p116
      %p118 = scmp.ne.s32.totalorder %s109, %s110
      %p119 = scmp.eq.s32.totalorder %s22, 0
      %p120 = por %p118, %p119
      %p121 = scmp.ne.s32.totalorder %s109, %s110
      %p122 = scmp.eq.s32.totalorder %s23, 1
      %p123 = por %p121, %p122
      %p125 = scmp.ne.s32.totalorder %s110, %s124
      %p126 = scmp.eq.s32.totalorder %s23, 0
      %p127 = por %p125, %p126
      %s129 = sadd.s32 %s128, 1
      %p132 = scmp.eq.s32.totalorder %s17, 1
      %p133 = scmp.ne.s32.totalorder %s128, %s130
      %p134 = scmp.eq.s32.totalorder %s17, 0
      %p135 = por %p133, %p134
      %p136 = scmp.ne.s32.totalorder %s128, %s130
      %p137 = scmp.eq.s32.totalorder %s22, 1
      %p138 = por %p136, %p137
      %p139 = scmp.ne.s32.totalorder %s130, %s131
      %p140 = scmp.eq.s32.totalorder %s22, 0
      %p141 = por %p139, %p140
      %p142 = scmp.ne.s32.totalorder %s130, %s131
      %p143 = scmp.eq.s32.totalorder %s23, 1
      %p144 = por %p142, %p143
      %p146 = scmp.ne.s32.totalorder %s131, %s145
      %p147 = scmp.eq.s32.totalorder %s23, 0
      %p148 = por %p146, %p147
      %s149 = ssub.s32 %s24, %s36
      %s150 = ssub.s32 %s25, %s32
      %s151 = sor.u32 %s149, %s150
      %p152 = scmp.eq.s32.totalorder %s151, 0
      %s154 = sadd.s32 %s153, 1
      %s155 = scalar_select %p152, %s153, %s154
      %p158 = pneg %p152
      %p159 = scmp.eq.s32.totalorder %s17, 1
      %p160 = por %p158, %p159
      %p161 = scmp.ne.s32.totalorder %s153, %s156
      %p162 = scmp.eq.s32.totalorder %s17, 0
      %p163 = por %p161, %p162
      %p164 = scmp.ne.s32.totalorder %s153, %s156
      %p165 = scmp.eq.s32.totalorder %s22, 1
      %p166 = por %p164, %p165
      %p167 = scmp.ne.s32.totalorder %s156, %s157
      %p168 = scmp.eq.s32.totalorder %s22, 0
      %p169 = por %p167, %p168
      %p170 = scmp.ne.s32.totalorder %s156, %s157
      %p171 = scmp.eq.s32.totalorder %s23, 1
      %p172 = por %p170, %p171
      %p174 = scmp.ne.s32.totalorder %s157, %s173
      %p175 = scmp.eq.s32.totalorder %s23, 0
      %p176 = por %p174, %p175
      %p177 = scmp.le.s32.totalorder 1, %s17
      %p178 = scmp.lt.s32.totalorder %s17, 3
      %p179 = pnand %p177, %p178
      %p180 = pneg %p179
      // Predicated region
      $region9: #{tpu_custom_call.1} parent=5 // pred_check
        _
      $region10: #{tpu_custom_call.1} parent=5 // pred_check_branch
        %182 = sbr.rel (%p179) target = $region12
      $region11: #{tpu_custom_call.1} parent=5 // pred_region
        %s183 = ssub.s32 %s17, 1
        // Predicated region
        $region13: #{tpu_custom_call.1} parent=11 // pred_check
          %p184 = pneg %p78
        $region14: #{tpu_custom_call.1} parent=11 // pred_check_branch
          %186 = sbr.rel (%p184) target = $region16
        $region15: #{tpu_custom_call.1} parent=11 // pred_region
          _
        $region16: #{tpu_custom_call.1} parent=11 // pred_fallthru
          _
        // Predicated region
        $region17: #{tpu_custom_call.1} parent=11 // pred_check
          %p187 = pneg %p99
        $region18: #{tpu_custom_call.1} parent=11 // pred_check_branch
          %189 = sbr.rel (%p187) target = $region20
        $region19: #{tpu_custom_call.1} parent=11 // pred_region
          _
        $region20: #{tpu_custom_call.1} parent=11 // pred_fallthru
          _
        // Predicated region
        $region21: #{tpu_custom_call.1} parent=11 // pred_check
          %p190 = pneg %p120
        $region22: #{tpu_custom_call.1} parent=11 // pred_check_branch
          %192 = sbr.rel (%p190) target = $region24
        $region23: #{tpu_custom_call.1} parent=11 // pred_region
          _
        $region24: #{tpu_custom_call.1} parent=11 // pred_fallthru
          _
        // Predicated region
        $region25: #{tpu_custom_call.1} parent=11 // pred_check
          %p193 = pneg %p141
        $region26: #{tpu_custom_call.1} parent=11 // pred_check_branch
          %195 = sbr.rel (%p193) target = $region28
        $region27: #{tpu_custom_call.1} parent=11 // pred_region
          _
        $region28: #{tpu_custom_call.1} parent=11 // pred_fallthru
          _
      $region12: #{tpu_custom_call.1} parent=5 // pred_fallthru
        _
      %p196 = scmp.lt.s32.totalorder %s17, 2
      // Predicated region
      $region29: #{tpu_custom_call.1} parent=5 // pred_check
        %p197 = pneg %p196
      $region30: #{tpu_custom_call.1} parent=5 // pred_check_branch
        %199 = sbr.rel (%p197) target = $region32
      $region31: #{tpu_custom_call.1} parent=5 // pred_region
        // Predicated region
        $region33: #{tpu_custom_call.1} parent=31 // pred_check
          %p200 = pneg %p51
        $region34: #{tpu_custom_call.1} parent=31 // pred_check_branch
          %202 = sbr.rel (%p200) target = $region36
        $region35: #{tpu_custom_call.1} parent=31 // pred_region
          %s203 = sand.u32 %s41, 1
          %s204 = scalar_lea.sflag [#allocation4], %s203
          %s205 = sand.u32 %s41, 1
          %s206 = smul.addr %s205, 12
          %s207 = scalar_lea.vmem [#allocation3], %s206
          %s209 = ssub.s32 192, 192
          %210 = vsyncadd %s204, %s209
          %s211 = smul.addr %s25, 3
          %s212 = smul.addr %s24, 3
          %s213 = sadd.s32 %s211, %s212
          %s214 = smul.addr %s213, 64
          %s215 = scalar_lea.hbm %s0, %s214
          %s217 = sshll.u32 %s207, 4
          %s218 = int_to_ptr.vmem [resolvable:$true] %s217
          %220 = dma.hbm_to_vmem [thread:$0]  %s215, 192, %s218, %s204
        $region36: #{tpu_custom_call.1} parent=31 // pred_fallthru
          _
      $region32: #{tpu_custom_call.1} parent=5 // pred_fallthru
        _
      %p221 = scmp.le.s32.totalorder 1, %s17
      %p222 = scmp.lt.s32.totalorder %s17, 3
      %p223 = pnand %p221, %p222
      %p224 = pneg %p223
      // Predicated region
      $region37: #{tpu_custom_call.1} parent=5 // pred_check
        _
      $region38: #{tpu_custom_call.1} parent=5 // pred_check_branch
        %226 = sbr.rel (%p223) target = $region40
      $region39: #{tpu_custom_call.1} parent=5 // pred_region
        %s227 = ssub.s32 %s17, 1
        %s228 = sand.u32 %s44, 1
        %s229 = scalar_lea.sflag [#allocation4], %s228
        %s230 = sand.u32 %s44, 1
        %s231 = smul.addr %s230, 12
        %s232 = scalar_lea.vmem [#allocation3], %s231
        // Predicated region
        $region41: #{tpu_custom_call.1} parent=39 // pred_check
          %p233 = pneg %p57
        $region42: #{tpu_custom_call.1} parent=39 // pred_check_branch
          %235 = sbr.rel (%p233) target = $region44
        $region43: #{tpu_custom_call.1} parent=39 // pred_region
          %236 = dma.done %s229, 192
        $region44: #{tpu_custom_call.1} parent=39 // pred_fallthru
          _
        %s237 = sand.u32 %s44, 1
        %s238 = scalar_lea.sflag [#allocation4], %s237
        %s239 = sand.u32 %s44, 1
        %s240 = smul.addr %s239, 12
        %s241 = scalar_lea.vmem [#allocation3], %s240
        %p242 = pneg %p57
        %p243 = pneg %p54
        %p244 = pneg %p78
        %p245 = pneg %p75
        %p246 = pneg %p99
        %p247 = pneg %p96
        %p248 = pneg %p120
        %p249 = pneg %p117
        %p250 = pneg %p141
        %p251 = pneg %p138
        %p252 = pneg %p169
        %p253 = pneg %p166
        %s254 = sand.u32 %s156, 1
        %s255 = scalar_lea.sflag [#allocation5], %s254
        %s256 = sand.u32 %s156, 1
        %s257 = smul.addr %s256, 8
        %s258 = scalar_lea.vmem [#allocation6], %s257
        %s259 = smul.u32 2, %s27
        %v260 = vld [vmem:[%s232] sm:$0xff]
        %v261 = vld [vmem:[%s232 + $0x8] sm:$0xf]
        %v262 = vlaneseq
        %v263 = vand.u32 %v262, 127
        %v264 = vadd.s32 %v263, 128
        %vm265 = vcmp.lt.s32.totalorder %v263, 0
        %v266 = vsub.s32 0, %v263
        %v267 = vsel %vm265, %v266, %v263
        %v268 = vshrl.u32 %v267, 4
        %v269 = vand.u32 %v267, 15
        %v270 = vsub.s32 0, %v269
        %v271 = vsel %vm265, %v270, %v269
        %vm272 = vcmp.lt.s32.totalorder %v264, 0
        %v273 = vsub.s32 0, %v264
        %v274 = vsel %vm272, %v273, %v264
        %v275 = vshrl.u32 %v274, 4
        %v276 = vand.u32 %v274, 15
        %v277 = vsub.s32 0, %v276
        %v278 = vsel %vm272, %v277, %v276
        %vm279 = vcmp.ne.s32.totalorder %v271, 0
        %vm280 = vcmp.ne.s32.totalorder %v278, 0
        %vm281 = vcmp.lt.s32.totalorder %v271, 0
        %vm282 = vcmp.lt.s32.totalorder %v278, 0
        %vm283 = vmand %vm281, %vm279
        %vm284 = vmand %vm282, %vm280
        %v285 = vadd.s32 %v271, 16
        %v286 = vadd.s32 %v278, 16
        %v287 = vsel %vm283, %v285, %v271
        %v288 = vsel %vm284, %v286, %v278
        %vm289 = vcmp.gt.s32.totalorder %v287, 0
        %vm290 = vcmp.gt.s32.totalorder %v288, 0
        %vm291 = vcmp.lt.s32.totalorder %v287, 15
        %vm292 = vcmp.lt.s32.totalorder %v288, 15
        %v293 = vsel %vm289, 1, 0
        %v294 = vsel %vm290, 1, 0
        %vm295 = vcmp.eq.s32.totalorder %v293, 1
        %vm296 = vcmp.eq.s32.totalorder %v294, 1
        %v299 = vcombine.high %v260, %v260
        %300 = vrot.lane.b32.xlu0 %v260, 113
        %v301 = vpop.permute.xlu0 %300
        %302 = vrot.lane.b32.xlu0 %v299, 113
        %v303 = vpop.permute.xlu0 %302
        %304 = vrot.lane.b32.xlu0 %v261, 113
        %v305 = vpop.permute.xlu0 %304
        %vm306 = vcmask 924672
        %v307 = vsel %vm306, %v301, %v303
        %v308 = vsel %vm306, %v303, %v305
        %v311 = vsel %vm295, %v307, 0.0
        %v312 = vsel %vm296, %v308, 0.0
        %313 = vst [vmem:[#allocation2] sm:$0xf] %v311
        %314 = vst [vmem:[#allocation2 + $0x8] sm:$0xf] %v312
        %v315 = vcombine.low %v260, %v260
        %v316 = vcombine.low %v261, %v261
        %317 = vrot.lane.b32.xlu0 %v315, 112
        %v318 = vpop.permute.xlu0 %317
        %319 = vrot.lane.b32.xlu0 %v260, 112
        %v320 = vpop.permute.xlu0 %319
        %321 = vrot.lane.b32.xlu0 %v316, 112
        %v322 = vpop.permute.xlu0 %321
        %vm323 = vcmask 916480
        %v324 = vsel %vm323, %v318, %v320
        %v325 = vsel %vm323, %v320, %v322
        %328 = vst [vmem:[#allocation2] sm:$0xf0] %v324
        %329 = vst [vmem:[#allocation2 + $0x8] sm:$0xf0] %v325
        %v330 = vsel %vm291, 1, 0
        %v331 = vsel %vm292, 1, 0
        %vm332 = vcmp.eq.s32.totalorder %v330, 1
        %vm333 = vcmp.eq.s32.totalorder %v331, 1
        %334 = vrot.lane.b32.xlu0 %v260, 111
        %v335 = vpop.permute.xlu0 %334
        %336 = vrot.lane.b32.xlu0 %v299, 111
        %v337 = vpop.permute.xlu0 %336
        %338 = vrot.lane.b32.xlu0 %v261, 111
        %v339 = vpop.permute.xlu0 %338
        %vm340 = vcmask 908288
        %v341 = vsel %vm340, %v335, %v337
        %v342 = vsel %vm340, %v337, %v339
        %v345 = vsel %vm332, %v341, 0.0
        %v346 = vsel %vm333, %v342, 0.0
        %347 = vst [vmem:[#allocation2 + $0x10] sm:$0xf] %v345
        %348 = vst [vmem:[#allocation2 + $0x18] sm:$0xf] %v346
        %349 = vrot.lane.b32.xlu0 %v260, 97
        %v350 = vpop.permute.xlu0 %349
        %351 = vrot.lane.b32.xlu0 %v299, 97
        %v352 = vpop.permute.xlu0 %351
        %353 = vrot.lane.b32.xlu0 %v261, 97
        %v354 = vpop.permute.xlu0 %353
        %vm355 = vcmask 793600
        %v356 = vsel %vm355, %v350, %v352
        %v357 = vsel %vm355, %v352, %v354
        %v360 = vsel %vm295, %v356, 0.0
        %v361 = vsel %vm296, %v357, 0.0
        %v364 = vrot.slane %v360, 4
        %v365 = vrot.slane %v361, 4
        %368 = vst [vmem:[#allocation2 + $0x10] sm:$0xf0] %v364
        %369 = vst [vmem:[#allocation2 + $0x18] sm:$0xf0] %v365
        %370 = vrot.lane.b32.xlu0 %v260, 96
        %v371 = vpop.permute.xlu0 %370
        %372 = vrot.lane.b32.xlu0 %v299, 96
        %v373 = vpop.permute.xlu0 %372
        %374 = vrot.lane.b32.xlu0 %v261, 96
        %v375 = vpop.permute.xlu0 %374
        %vm376 = vcmask 785408
        %v377 = vsel %vm376, %v371, %v373
        %v378 = vsel %vm376, %v373, %v375
        %381 = vst [vmem:[#allocation2 + $0x20] sm:$0xf] %v377
        %382 = vst [vmem:[#allocation2 + $0x28] sm:$0xf] %v378
        %383 = vrot.lane.b32.xlu0 %v260, 95
        %v384 = vpop.permute.xlu0 %383
        %385 = vrot.lane.b32.xlu0 %v299, 95
        %v386 = vpop.permute.xlu0 %385
        %387 = vrot.lane.b32.xlu0 %v261, 95
        %v388 = vpop.permute.xlu0 %387
        %vm389 = vcmask 777216
        %v390 = vsel %vm389, %v384, %v386
        %v391 = vsel %vm389, %v386, %v388
        %v394 = vsel %vm332, %v390, 0.0
        %v395 = vsel %vm333, %v391, 0.0
        %v398 = vrot.slane %v394, 4
        %v399 = vrot.slane %v395, 4
        %402 = vst [vmem:[#allocation2 + $0x20] sm:$0xf0] %v398
        %403 = vst [vmem:[#allocation2 + $0x28] sm:$0xf0] %v399
        %404 = vrot.lane.b32.xlu0 %v260, 81
        %v405 = vpop.permute.xlu0 %404
        %406 = vrot.lane.b32.xlu0 %v299, 81
        %v407 = vpop.permute.xlu0 %406
        %408 = vrot.lane.b32.xlu0 %v261, 81
        %v409 = vpop.permute.xlu0 %408
        %vm410 = vcmask 662528
        %v411 = vsel %vm410, %v405, %v407
        %v412 = vsel %vm410, %v407, %v409
        %v415 = vsel %vm295, %v411, 0.0
        %v416 = vsel %vm296, %v412, 0.0
        %417 = vst [vmem:[#allocation2 + $0x30] sm:$0xf] %v415
        %418 = vst [vmem:[#allocation2 + $0x38] sm:$0xf] %v416
        %419 = vrot.lane.b32.xlu0 %v315, 80
        %v420 = vpop.permute.xlu0 %419
        %421 = vrot.lane.b32.xlu0 %v260, 80
        %v422 = vpop.permute.xlu0 %421
        %423 = vrot.lane.b32.xlu0 %v316, 80
        %v424 = vpop.permute.xlu0 %423
        %vm425 = vcmask 654336
        %v426 = vsel %vm425, %v420, %v422
        %v427 = vsel %vm425, %v422, %v424
        %430 = vst [vmem:[#allocation2 + $0x30] sm:$0xf0] %v426
        %431 = vst [vmem:[#allocation2 + $0x38] sm:$0xf0] %v427
        %432 = vrot.lane.b32.xlu0 %v260, 79
        %v433 = vpop.permute.xlu0 %432
        %434 = vrot.lane.b32.xlu0 %v299, 79
        %v435 = vpop.permute.xlu0 %434
        %436 = vrot.lane.b32.xlu0 %v261, 79
        %v437 = vpop.permute.xlu0 %436
        %vm438 = vcmask 646144
        %v439 = vsel %vm438, %v433, %v435
        %v440 = vsel %vm438, %v435, %v437
        %v443 = vsel %vm332, %v439, 0.0
        %v444 = vsel %vm333, %v440, 0.0
        %445 = vst [vmem:[#allocation2 + $0x40] sm:$0xf] %v443
        %446 = vst [vmem:[#allocation2 + $0x48] sm:$0xf] %v444
        %v447 = vld [vmem:[%s1] sm:$0xff]
        %v448 = vld [vmem:[#allocation2] sm:$0xff]
        %v449 = vld [vmem:[#allocation2 + $0x8] sm:$0xff]
        %v450 = vld [vmem:[#allocation2 + $0x10] sm:$0xff]
        %v451 = vld [vmem:[#allocation2 + $0x18] sm:$0xff]
        %v452 = vld [vmem:[#allocation2 + $0x20] sm:$0xff]
        %v453 = vld [vmem:[#allocation2 + $0x28] sm:$0xff]
        %v454 = vld [vmem:[#allocation2 + $0x30] sm:$0xff]
        %v455 = vld [vmem:[#allocation2 + $0x38] sm:$0xff]
        %v456 = vld [vmem:[#allocation2 + $0x40] sm:$0xf]
        %v457 = vld [vmem:[#allocation2 + $0x48] sm:$0xf]
        %v458 = vld [vmem:[%s2] sm:$0xff]
        %460 = vset.pattern.permute.xlu0 0
        %461 = vperm.xlu0 %460, %v458
        %v462 = vpop.permute.xlu0 %461
        %vm464 = vcmask 293888
        %v466 = vsel %vm464, %v447, 0
        %vm468 = vcmask 1043456
        %v470 = vsel %vm468, %v456, 0
        %v473 = vsel %vm468, %v457, 0
        %475 = vmatprep.subr.mxu0 0.0
        %476 = vmatpush1.msra.mxu0 0.0
        %477 = vmatprep.subr.mxu0 0.0
        %478 = vmatpush1.msra.mxu0 0.0
        %479 = vmatprep.subr.mxu0 0.0
        %480 = vmatpush1.msra.mxu0 0.0
        %481 = vmatprep.subr.mxu0 0.0
        %482 = vmatpush1.msra.mxu0 0.0
        %483 = vmatprep.subr.mxu0 0.0
        %484 = vmatpush1.msra.mxu0 0.0
        %485 = vmatprep.subr.mxu0 0.0
        %486 = vmatpush1.msra.mxu0 0.0
        %487 = vmatprep.subr.mxu0 0.0
        %488 = vmatpush1.msra.mxu0 0.0
        %489 = vmatprep.subr.mxu0 0.0
        %490 = vmatpush1.msra.mxu0 0.0
        %491 = vmatprep.subr.mxu0 0.0
        %492 = vmatpush1.msra.mxu0 0.0
        %493 = vmatprep.subr.mxu0 0.0
        %494 = vmatpush1.msra.mxu0 0.0
        %495 = vmatprep.subr.mxu0 0.0
        %496 = vmatpush1.msra.mxu0 0.0
        %497 = vmatprep.subr.mxu0 %v473
        %498 = vmatpush1.msra.mxu0 %v470
        %499 = vmatprep.subr.mxu0 %v455
        %500 = vmatpush1.msra.mxu0 %v454
        %501 = vmatprep.subr.mxu0 %v453
        %502 = vmatpush1.msra.mxu0 %v452
        %503 = vmatprep.subr.mxu0 %v451
        %504 = vmatpush1.msra.mxu0 %v450
        %505 = vmatprep.subr.mxu0 %v449
        %506 = vmatpush1.msra.mxu0 %v448
        %507 = vmatprep.subr.mxu0 0.0
        %508 = vmatpush2.msra.mxu0 0.0
        %509 = vmatprep.subr.mxu0 0.0
        %510 = vmatpush2.msra.mxu0 0.0
        %511 = vmatprep.subr.mxu0 0.0
        %512 = vmatpush2.msra.mxu0 0.0
        %513 = vmatprep.subr.mxu0 0.0
        %514 = vmatpush2.msra.mxu0 0.0
        %515 = vmatprep.subr.mxu0 0.0
        %516 = vmatpush2.msra.mxu0 0.0
        %517 = vmatprep.subr.mxu0 0.0
        %518 = vmatpush2.msra.mxu0 0.0
        %519 = vmatprep.subr.mxu0 0.0
        %520 = vmatpush2.msra.mxu0 0.0
        %521 = vmatprep.subr.mxu0 0.0
        %522 = vmatpush2.msra.mxu0 0.0
        %523 = vmatprep.subr.mxu0 0.0
        %524 = vmatpush2.msra.mxu0 0.0
        %525 = vmatprep.subr.mxu0 0.0
        %526 = vmatpush2.msra.mxu0 0.0
        %527 = vmatprep.subr.mxu0 0.0
        %528 = vmatpush2.msra.mxu0 0.0
        %529 = vmatprep.subr.mxu0 0.0
        %530 = vmatpush2.msra.mxu0 0.0
        %531 = vmatprep.subr.mxu0 0.0
        %532 = vmatpush2.msra.mxu0 0.0
        %533 = vmatprep.subr.mxu0 0.0
        %534 = vmatpush2.msra.mxu0 0.0
        %535 = vmatprep.subr.mxu0 0.0
        %536 = vmatpush2.msra.mxu0 0.0
        %537 = vmatprep.subr.mxu0 0.0
        %538 = vmatpush2.msra.mxu0 0.0
        %539 = vmatprep.mubr.f32.mxu0 0.0
        %540 = vmatmul.mubr.f32.gmra.mxu0 %v466
        %v541 = vpop.f32.mrf.mxu0
        %v542 = vadd.f32 %v462, %v541
        %v543 = vpop.f32.mrf.mxu0
        %v544 = vadd.f32 %v462, %v543
        %545 = vdwg.mxu0
        %v546 = vld [vmem:[%s3] sm:$0xf]
        %v547 = vld [vmem:[%s4] sm:$0xf]
        %549 = vset.pattern.permute.xlu0 0
        %550 = vperm.xlu0 %549, %v547
        %v551 = vpop.permute.xlu0 %550
        %vm553 = vcmask 64512
        %v555 = vsel %vm553, %v546, 0
        %557 = vmatprep.subr.mxu0 0.0
        %558 = vmatpush1.msra.mxu0 0.0
        %559 = vmatprep.subr.mxu0 0.0
        %560 = vmatpush1.msra.mxu0 0.0
        %561 = vmatprep.subr.mxu0 0.0
        %562 = vmatpush1.msra.mxu0 0.0
        %563 = vmatprep.subr.mxu0 0.0
        %564 = vmatpush1.msra.mxu0 0.0
        %565 = vmatprep.subr.mxu0 0.0
        %566 = vmatpush1.msra.mxu0 0.0
        %567 = vmatprep.subr.mxu0 0.0
        %568 = vmatpush1.msra.mxu0 0.0
        %569 = vmatprep.subr.mxu0 0.0
        %570 = vmatpush1.msra.mxu0 0.0
        %571 = vmatprep.subr.mxu0 0.0
        %572 = vmatpush1.msra.mxu0 0.0
        %573 = vmatprep.subr.mxu0 0.0
        %574 = vmatpush1.msra.mxu0 0.0
        %575 = vmatprep.subr.mxu0 0.0
        %576 = vmatpush1.msra.mxu0 0.0
        %577 = vmatprep.subr.mxu0 0.0
        %578 = vmatpush1.msra.mxu0 0.0
        %579 = vmatprep.subr.mxu0 0.0
        %580 = vmatpush1.msra.mxu0 0.0
        %581 = vmatprep.subr.mxu0 0.0
        %582 = vmatpush1.msra.mxu0 0.0
        %583 = vmatprep.subr.mxu0 0.0
        %584 = vmatpush1.msra.mxu0 0.0
        %585 = vmatprep.subr.mxu0 0.0
        %586 = vmatpush1.msra.mxu0 0.0
        %587 = vmatprep.subr.mxu0 %v544
        %588 = vmatpush1.msra.mxu0 %v542
        %589 = vmatprep.subr.mxu0 0.0
        %590 = vmatpush2.msra.mxu0 0.0
        %591 = vmatprep.subr.mxu0 0.0
        %592 = vmatpush2.msra.mxu0 0.0
        %593 = vmatprep.subr.mxu0 0.0
        %594 = vmatpush2.msra.mxu0 0.0
        %595 = vmatprep.subr.mxu0 0.0
        %596 = vmatpush2.msra.mxu0 0.0
        %597 = vmatprep.subr.mxu0 0.0
        %598 = vmatpush2.msra.mxu0 0.0
        %599 = vmatprep.subr.mxu0 0.0
        %600 = vmatpush2.msra.mxu0 0.0
        %601 = vmatprep.subr.mxu0 0.0
        %602 = vmatpush2.msra.mxu0 0.0
        %603 = vmatprep.subr.mxu0 0.0
        %604 = vmatpush2.msra.mxu0 0.0
        %605 = vmatprep.subr.mxu0 0.0
        %606 = vmatpush2.msra.mxu0 0.0
        %607 = vmatprep.subr.mxu0 0.0
        %608 = vmatpush2.msra.mxu0 0.0
        %609 = vmatprep.subr.mxu0 0.0
        %610 = vmatpush2.msra.mxu0 0.0
        %611 = vmatprep.subr.mxu0 0.0
        %612 = vmatpush2.msra.mxu0 0.0
        %613 = vmatprep.subr.mxu0 0.0
        %614 = vmatpush2.msra.mxu0 0.0
        %615 = vmatprep.subr.mxu0 0.0
        %616 = vmatpush2.msra.mxu0 0.0
        %617 = vmatprep.subr.mxu0 0.0
        %618 = vmatpush2.msra.mxu0 0.0
        %619 = vmatprep.subr.mxu0 0.0
        %620 = vmatpush2.msra.mxu0 0.0
        %621 = vmatprep.mubr.f32.mxu0 0.0
        %622 = vmatmul.mubr.f32.gmra.mxu0 %v555
        %v623 = vpop.f32.mrf.mxu0
        %v624 = vadd.f32 %v551, %v623
        %v625 = vpop.f32.mrf.mxu0
        %v626 = vadd.f32 %v551, %v625
        %627 = vdwg.mxu0
        %v628 = vadd.f32 %v624, %v377
        %v629 = vadd.f32 %v626, %v378
        %v632 = vcombine.low %v628, %v629
        %634 = vst [vmem:[%s258] sm:$0xff] %v632
        %s635 = sand.u32 %s156, 1
        %s636 = scalar_lea.sflag [#allocation5], %s635
        %s637 = sand.u32 %s156, 1
        %s638 = smul.addr %s637, 8
        %s639 = scalar_lea.vmem [#allocation6], %s638
        // Predicated region
        $region45: #{tpu_custom_call.1} parent=39 // pred_check
          %p640 = pneg %p166
        $region46: #{tpu_custom_call.1} parent=39 // pred_check_branch
          %642 = sbr.rel (%p640) target = $region48
        $region47: #{tpu_custom_call.1} parent=39 // pred_region
          %s643 = smul.u32 2, %s27
          %s645 = ssub.s32 128, 128
          %646 = vsyncadd %s636, %s645
          %s647 = smul.addr %s26, 2
          %s648 = sadd.s32 %s643, %s647
          %s649 = smul.addr %s648, 64
          %s650 = scalar_lea.hbm %s5, %s649
          %s652 = sshll.u32 %s639, 4
          %s653 = int_to_ptr.vmem [resolvable:$true] %s652
          %655 = dma.vmem_to_hbm [thread:$0]  %s653, 128, %s650, %s636
        $region48: #{tpu_custom_call.1} parent=39 // pred_fallthru
          _
      $region40: #{tpu_custom_call.1} parent=5 // pred_fallthru
        _
      %p656 = scmp.le.s32.totalorder 2, %s17
      // Predicated region
      $region49: #{tpu_custom_call.1} parent=5 // pred_check
        %p657 = pneg %p656
      $region50: #{tpu_custom_call.1} parent=5 // pred_check_branch
        %659 = sbr.rel (%p657) target = $region52
      $region51: #{tpu_custom_call.1} parent=5 // pred_region
        %s660 = ssub.s32 %s17, 2
        // Predicated region
        $region53: #{tpu_custom_call.1} parent=51 // pred_check
          %p661 = pneg %p172
        $region54: #{tpu_custom_call.1} parent=51 // pred_check_branch
          %663 = sbr.rel (%p661) target = $region56
        $region55: #{tpu_custom_call.1} parent=51 // pred_region
          %s664 = sand.u32 %s157, 1
          %s665 = scalar_lea.sflag [#allocation5], %s664
          %s666 = sand.u32 %s157, 1
          %s667 = smul.addr %s666, 8
          %s668 = scalar_lea.vmem [#allocation6], %s667
          %669 = dma.done %s665, 128
        $region56: #{tpu_custom_call.1} parent=51 // pred_fallthru
          _
      $region52: #{tpu_custom_call.1} parent=5 // pred_fallthru
        _
    $region6: #{tpu_custom_call.1} parent=1 // loop_footer
      %s21 = sadd.s32 1, %s17
    $region7: #{tpu_custom_call.1} parent=1 // loop_footer_branch
      %16 = sbr.rel target = $region3
    $region8: #{tpu_custom_call.1} parent=1 // loop_exit
      _
    %670 = vsyncpa [#allocation4], 1
    %s671 = scalar_lea.sflag [#allocation4], 1
    %672 = vsyncpa %s671, 1
    %673 = vsyncpa [#allocation5], 1
    %s674 = scalar_lea.sflag [#allocation5], 1
    %675 = vsyncpa %s674, 1

</llo_original>
